<compile_context>
chip_gen: v6e
topology: v6e:2x2x1
jax: 0.10.0
libtpu: 0.0.40
codegen_flags: <defaults>
</compile_context>

<pallas_src>
import functools

import jax
import jax.numpy as jnp
from jax.experimental import pallas as pl
from jax.experimental.pallas import tpu as pltpu


def _round_up(n, m):
    return ((n + m - 1) // m) * m


def _query_vmem_soft_cap():
    # Conservative budget for one VMEM-resident block: half of physical VMEM
    # minus headroom (v5e/v6e: 128 MiB, v7x: 64 MiB per core).
    try:
        cap = int(pltpu.get_tpu_info().vmem_capacity_bytes)
    except Exception:
        cap = 64 << 20
    return max(cap // 2 - (8 << 20), 16 << 20)


_VMEM_SOFT_CAP = _query_vmem_soft_cap()


# -----------------------------------------------------------------------------
# Fused kernel: MLP (ReLU hidden layers) -> logits -> softmax over dim=0
# (the batch axis), one VMEM-resident block, single dispatch.
# -----------------------------------------------------------------------------
def _actor_fused_kernel(x_ref, *refs, num_valid_rows):
    """refs = (w0, b0, w1, b1, ..., wL, bL, out)."""
    out_ref = refs[-1]
    wb = refs[:-1]
    n_lin = len(wb) // 2

    h = x_ref[...]                                        # (Bp, S) f32
    for l in range(n_lin):
        w = wb[2 * l][...]                                # (K, N) f32 -> MXU
        b = wb[2 * l + 1][...]                            # (1, N) f32
        z = jnp.dot(h, w, preferred_element_type=jnp.float32) + b
        h = jnp.maximum(z, 0.0) if l < n_lin - 1 else z   # ReLU on hidden layers

    # dim=0 softmax (across the batch).  Padded batch rows must not contribute
    # to the column denominators: mask them to -inf so exp() -> 0.
    if num_valid_rows < h.shape[0]:
        rows = jax.lax.broadcasted_iota(jnp.int32, h.shape, 0)
        h = jnp.where(rows < num_valid_rows, h, -jnp.inf)
    m = jnp.max(h, axis=0, keepdims=True)                 # XLU cross-sublane reduce
    e = jnp.exp(h - m)                                    # EUP
    s = jnp.sum(e, axis=0, keepdims=True)
    inv = pl.reciprocal(s, approx=True)                   # EUP vrcp (free slot)
    inv = inv * (2.0 - s * inv)                           # one Newton step -> ~f32 exact
    out_ref[...] = e * inv                                # (Bp, 128) lane-dense vst


# -----------------------------------------------------------------------------
# Fallback kernel (only for batches too large to hold as one VMEM block):
# batch-tiled MLP -> logits; column softmax then done in XLA.
# -----------------------------------------------------------------------------
def _mlp_logits_kernel(x_ref, *refs):
    out_ref = refs[-1]
    wb = refs[:-1]
    n_lin = len(wb) // 2
    h = x_ref[...]
    for l in range(n_lin):
        w = wb[2 * l][...]
        b = wb[2 * l + 1][...]
        z = jnp.dot(h, w, preferred_element_type=jnp.float32) + b
        h = jnp.maximum(z, 0.0) if l < n_lin - 1 else z
    out_ref[...] = h


# -----------------------------------------------------------------------------
# One-time parameter packing (hoisted out of the per-step path).
# -----------------------------------------------------------------------------
def pack_params(params):
    """params: list of (W (in,out), b (1,out)).  Pads the final layer's output
    features to 128 lanes (lane-dense stores); keeps everything f32."""
    action_space = params[-1][0].shape[1]
    a_pad = _round_up(action_space, 128)
    flat = []
    for (w, b) in params[:-1]:
        flat.append(jnp.asarray(w, jnp.float32))
        flat.append(jnp.asarray(b, jnp.float32).reshape(1, -1))
    w_l, b_l = params[-1]
    w_p = jnp.zeros((w_l.shape[0], a_pad), jnp.float32).at[:, :action_space].set(
        jnp.asarray(w_l, jnp.float32))
    b_p = jnp.zeros((1, a_pad), jnp.float32).at[:, :action_space].set(
        jnp.asarray(b_l, jnp.float32).reshape(1, -1))
    flat += [w_p, b_p]
    return tuple(flat), action_space


# -----------------------------------------------------------------------------
# Forward pass (jitted; action_space is static).
# -----------------------------------------------------------------------------
@functools.partial(jax.jit, static_argnums=(2,))
def actor_forward(x, flat_wb, action_space):
    batch, state_space = x.shape
    a_pad = flat_wb[-1].shape[1]

    # Pad batch to a sublane multiple; padded rows are masked inside the kernel.
    batch_p = _round_up(max(batch, 1), 8)
    if batch_p != batch:
        x = jnp.pad(x, ((0, batch_p - batch), (0, 0)))

    wb_bytes = sum(int(a.size) * 4 for a in flat_wb)
    io_bytes = batch_p * state_space * 4 + batch_p * a_pad * 4
    needed = wb_bytes + io_bytes

    flops = 0
    for l in range(len(flat_wb) // 2):
        k, n = flat_wb[2 * l].shape
        flops += 2 * batch_p * k * n

    if needed <= _VMEM_SOFT_CAP:
        # --- primary path: single fused call, everything VMEM-resident ------
        cost = pl.CostEstimate(flops=flops,
                               transcendentals=batch_p * a_pad,
                               bytes_accessed=needed)
        vmem_spec = pl.BlockSpec(memory_space=pltpu.MemorySpace.VMEM)
        probs_p = pl.pallas_call(
            functools.partial(_actor_fused_kernel, num_valid_rows=batch),
            out_shape=jax.ShapeDtypeStruct((batch_p, a_pad), jnp.float32),
            in_specs=[vmem_spec] * (1 + len(flat_wb)),
            out_specs=vmem_spec,
            compiler_params=pltpu.CompilerParams(
                vmem_limit_bytes=min(max(2 * needed + (2 << 20), 16 << 20),
                                     32 << 20)),
            cost_estimate=cost,
        )(x, *flat_wb)
        return probs_p[:batch, :action_space]

    # --- fallback: batch-tiled MLP kernel + XLA column softmax ---------------
    # TODO(synk): streamed two-pass dim=0 softmax in Pallas for this regime.
    tb = 512
    batch_p2 = _round_up(batch_p, tb)
    if batch_p2 != batch_p:
        x = jnp.pad(x, ((0, batch_p2 - batch_p), (0, 0)))
    in_specs = [pl.BlockSpec((tb, state_space), lambda i: (i, 0))]
    for a in flat_wb:
        in_specs.append(pl.BlockSpec(a.shape, lambda i: (0, 0)))  # resident
    cost = pl.CostEstimate(flops=flops, transcendentals=0, bytes_accessed=needed)
    logits_p = pl.pallas_call(
        _mlp_logits_kernel,
        out_shape=jax.ShapeDtypeStruct((batch_p2, a_pad), jnp.float32),
        grid=(batch_p2 // tb,),
        in_specs=in_specs,
        out_specs=pl.BlockSpec((tb, a_pad), lambda i: (i, 0)),
        compiler_params=pltpu.CompilerParams(
            dimension_semantics=("parallel",)),
        cost_estimate=cost,
    )(x, *flat_wb)
    probs = jax.nn.softmax(logits_p[:batch], axis=0)
    return probs[:, :action_space]


# -----------------------------------------------------------------------------
# Init + pure-JAX reference
# -----------------------------------------------------------------------------
def init_params(key, state_space, action_space, num_hidden_layer, hidden_dim):
    dims = [state_space] + [hidden_dim] * (num_hidden_layer + 1) + [action_space]
    params = []
    for i in range(len(dims) - 1):
        key, kw, kb = jax.random.split(key, 3)
        bound = 1.0 / jnp.sqrt(dims[i])
        w = jax.random.uniform(kw, (dims[i], dims[i + 1]), jnp.float32, -bound, bound)
        b = jax.random.uniform(kb, (1, dims[i + 1]), jnp.float32, -bound, bound)
        params.append((w, b))
    return params


def actor_ref(x, params):
    h = x
    for (w, b) in params[:-1]:
        h = jnp.maximum(jnp.dot(h, w) + b, 0.0)
    w, b = params[-1]
    logits = jnp.dot(h, w) + b
    return jax.nn.softmax(logits, axis=0)       # dim=0, matching the PyTorch module


if __name__ == "__main__":
    state_space = 16
    action_space = 4
    num_hidden_layer = 2
    hidden_dim = state_space * 2        # module default
    batch = 50                          # not a multiple of 8 -> exercises the in-kernel row mask

    key = jax.random.PRNGKey(0)
    key, kx = jax.random.split(key)
    x = jax.random.normal(kx, (batch, state_space), jnp.float32)
    params = init_params(key, state_space, action_space, num_hidden_layer, hidden_dim)

    flat_wb, a_sp = pack_params(params)           # one-time pack, outside the step loop
    out = jax.block_until_ready(actor_forward(x, flat_wb, a_sp))
    ref = actor_ref(x, params)

    assert out.shape == (batch, action_space)
    # f32 matmuls in-kernel vs XLA default matmul precision: modest tolerance.
    assert jnp.allclose(out, ref, rtol=2e-3, atol=1e-4), "mismatch vs reference"
    # softmax over dim=0: each column sums to 1 (Newton-refined reciprocal)
    assert jnp.allclose(jnp.sum(out, axis=0), jnp.ones((action_space,)), atol=1e-5)

    print("KERNEL_OK")
</pallas_src>

<mosaic_0001>
module attributes {stable_mosaic.version = 11 : i64} {
  func.func @_actor_fused_kernel(%arg0: memref<56x16xf32, #tpu.memory_space<vmem>>, %arg1: memref<16x32xf32, #tpu.memory_space<vmem>>, %arg2: memref<1x32xf32, #tpu.memory_space<vmem>>, %arg3: memref<32x32xf32, #tpu.memory_space<vmem>>, %arg4: memref<1x32xf32, #tpu.memory_space<vmem>>, %arg5: memref<32x32xf32, #tpu.memory_space<vmem>>, %arg6: memref<1x32xf32, #tpu.memory_space<vmem>>, %arg7: memref<32x128xf32, #tpu.memory_space<vmem>>, %arg8: memref<1x128xf32, #tpu.memory_space<vmem>>, %arg9: memref<56x128xf32, #tpu.memory_space<vmem>>) attributes {dimension_semantics = [], scalar_prefetch = 0 : i64, scratch_operands = 0 : i64, tpu.core_type = #tpu.core_type<tc>} {
    %c0 = arith.constant 0 : index
    %c0_0 = arith.constant 0 : index
    %0 = vector.load %arg0[%c0, %c0_0] : memref<56x16xf32, #tpu.memory_space<vmem>>, vector<56x16xf32>
    %c0_1 = arith.constant 0 : index
    %c0_2 = arith.constant 0 : index
    %1 = vector.load %arg1[%c0_1, %c0_2] : memref<16x32xf32, #tpu.memory_space<vmem>>, vector<16x32xf32>
    %c0_3 = arith.constant 0 : index
    %c0_4 = arith.constant 0 : index
    %2 = vector.load %arg2[%c0_3, %c0_4] : memref<1x32xf32, #tpu.memory_space<vmem>>, vector<1x32xf32>
    %cst = arith.constant dense<0.000000e+00> : vector<56x32xf32>
    %3 = tpu.matmul %0, %1, %cst {dimension_numbers = #tpu.dot_dimension_numbers<[1], [0], [0], [1], [0, 0, 1, 1], [], []>} : vector<56x16xf32>, vector<16x32xf32>, vector<56x32xf32> -> vector<56x32xf32>
    %4 = vector.broadcast %2 : vector<1x32xf32> to vector<56x32xf32>
    %5 = arith.addf %3, %4 : vector<56x32xf32>
    %cst_5 = arith.constant 0.000000e+00 : f32
    %6 = vector.broadcast %cst_5 : f32 to vector<56x32xf32>
    %7 = arith.maximumf %5, %6 : vector<56x32xf32>
    %c0_6 = arith.constant 0 : index
    %c0_7 = arith.constant 0 : index
    %8 = vector.load %arg3[%c0_6, %c0_7] : memref<32x32xf32, #tpu.memory_space<vmem>>, vector<32x32xf32>
    %c0_8 = arith.constant 0 : index
    %c0_9 = arith.constant 0 : index
    %9 = vector.load %arg4[%c0_8, %c0_9] : memref<1x32xf32, #tpu.memory_space<vmem>>, vector<1x32xf32>
    %cst_10 = arith.constant dense<0.000000e+00> : vector<56x32xf32>
    %10 = tpu.matmul %7, %8, %cst_10 {dimension_numbers = #tpu.dot_dimension_numbers<[1], [0], [0], [1], [0, 0, 1, 1], [], []>} : vector<56x32xf32>, vector<32x32xf32>, vector<56x32xf32> -> vector<56x32xf32>
    %11 = vector.broadcast %9 : vector<1x32xf32> to vector<56x32xf32>
    %12 = arith.addf %10, %11 : vector<56x32xf32>
    %cst_11 = arith.constant 0.000000e+00 : f32
    %13 = vector.broadcast %cst_11 : f32 to vector<56x32xf32>
    %14 = arith.maximumf %12, %13 : vector<56x32xf32>
    %c0_12 = arith.constant 0 : index
    %c0_13 = arith.constant 0 : index
    %15 = vector.load %arg5[%c0_12, %c0_13] : memref<32x32xf32, #tpu.memory_space<vmem>>, vector<32x32xf32>
    %c0_14 = arith.constant 0 : index
    %c0_15 = arith.constant 0 : index
    %16 = vector.load %arg6[%c0_14, %c0_15] : memref<1x32xf32, #tpu.memory_space<vmem>>, vector<1x32xf32>
    %cst_16 = arith.constant dense<0.000000e+00> : vector<56x32xf32>
    %17 = tpu.matmul %14, %15, %cst_16 {dimension_numbers = #tpu.dot_dimension_numbers<[1], [0], [0], [1], [0, 0, 1, 1], [], []>} : vector<56x32xf32>, vector<32x32xf32>, vector<56x32xf32> -> vector<56x32xf32>
    %18 = vector.broadcast %16 : vector<1x32xf32> to vector<56x32xf32>
    %19 = arith.addf %17, %18 : vector<56x32xf32>
    %cst_17 = arith.constant 0.000000e+00 : f32
    %20 = vector.broadcast %cst_17 : f32 to vector<56x32xf32>
    %21 = arith.maximumf %19, %20 : vector<56x32xf32>
    %c0_18 = arith.constant 0 : index
    %c0_19 = arith.constant 0 : index
    %22 = vector.load %arg7[%c0_18, %c0_19] : memref<32x128xf32, #tpu.memory_space<vmem>>, vector<32x128xf32>
    %c0_20 = arith.constant 0 : index
    %c0_21 = arith.constant 0 : index
    %23 = vector.load %arg8[%c0_20, %c0_21] : memref<1x128xf32, #tpu.memory_space<vmem>>, vector<1x128xf32>
    %cst_22 = arith.constant dense<0.000000e+00> : vector<56x128xf32>
    %24 = tpu.matmul %21, %22, %cst_22 {dimension_numbers = #tpu.dot_dimension_numbers<[1], [0], [0], [1], [0, 0, 1, 1], [], []>} : vector<56x32xf32>, vector<32x128xf32>, vector<56x128xf32> -> vector<56x128xf32>
    %25 = vector.broadcast %23 : vector<1x128xf32> to vector<56x128xf32>
    %26 = arith.addf %24, %25 : vector<56x128xf32>
    %27 = tpu.iota {dimensions = array<i32: 0>} : vector<56x128xi32>
    %c50_i32 = arith.constant 50 : i32
    %28 = vector.broadcast %c50_i32 : i32 to vector<56x128xi32>
    %29 = arith.cmpi slt, %27, %28 : vector<56x128xi32>
    %cst_23 = arith.constant 0xFF800000 : f32
    %30 = vector.broadcast %cst_23 : f32 to vector<56x128xf32>
    %31 = arith.select %29, %26, %30 : vector<56x128xi1>, vector<56x128xf32>
    %cst_24 = arith.constant dense<0xFF800000> : vector<128xf32>
    %32 = vector.multi_reduction <maximumf>, %31, %cst_24 [0] : vector<56x128xf32> to vector<128xf32>
    %33 = vector.shape_cast %32 : vector<128xf32> to vector<1x128xf32>
    %34 = vector.broadcast %33 : vector<1x128xf32> to vector<56x128xf32>
    %35 = arith.subf %31, %34 : vector<56x128xf32>
    %36 = math.exp %35 : vector<56x128xf32>
    %cst_25 = arith.constant dense<0.000000e+00> : vector<128xf32>
    %37 = vector.multi_reduction <add>, %36, %cst_25 [0] : vector<56x128xf32> to vector<128xf32>
    %38 = vector.shape_cast %37 : vector<128xf32> to vector<1x128xf32>
    %39 = tpu.reciprocal %38 {approx = true} : vector<1x128xf32> -> vector<1x128xf32>
    %40 = arith.mulf %38, %39 : vector<1x128xf32>
    %cst_26 = arith.constant 2.000000e+00 : f32
    %41 = vector.broadcast %cst_26 : f32 to vector<1x128xf32>
    %42 = arith.subf %41, %40 : vector<1x128xf32>
    %43 = arith.mulf %39, %42 : vector<1x128xf32>
    %44 = vector.broadcast %43 : vector<1x128xf32> to vector<56x128xf32>
    %45 = arith.mulf %36, %44 : vector<56x128xf32>
    %c0_27 = arith.constant 0 : index
    %c0_28 = arith.constant 0 : index
    %46 = vector.load %arg9[%c0_27, %c0_28] : memref<56x128xf32, #tpu.memory_space<vmem>>, vector<56x128xf32>
    tpu.vector_store %arg9[%c0_27, %c0_28], %45 {strides = array<i32>} : memref<56x128xf32, #tpu.memory_space<vmem>>, vector<56x128xf32>,
    return
  }
}

</mosaic_0001>

<llo_original>
// kernel: actor_forward.1
$region0: #{actor_forward.1}
  #allocation0 [shape = 'u32[]', space=smem, size = 0x4, offset = 0x4, fixed_abs, tag = 'smem constant byte address 0x4 - core index']
  #allocation1 [shape = 'u32[144,128]{1,0:T(1,128)}', space=vmem, size = 0x12000, scoped, tag = 'internal scratch']
  %s0 = inlined_call_operand.vmem [shape: f32[56,16], index: 0, kind: input, shape index: {}]
  %s1 = inlined_call_operand.vmem [shape: f32[16,32], index: 1, kind: input, shape index: {}]
  %s2 = inlined_call_operand.vmem [shape: f32[1,32], index: 2, kind: input, shape index: {}]
  %s3 = inlined_call_operand.vmem [shape: f32[32,32], index: 3, kind: input, shape index: {}]
  %s4 = inlined_call_operand.vmem [shape: f32[1,32], index: 4, kind: input, shape index: {}]
  %s5 = inlined_call_operand.vmem [shape: f32[32,32], index: 5, kind: input, shape index: {}]
  %s6 = inlined_call_operand.vmem [shape: f32[1,32], index: 6, kind: input, shape index: {}]
  %s7 = inlined_call_operand.vmem [shape: f32[32,128], index: 7, kind: input, shape index: {}]
  %s8 = inlined_call_operand.vmem [shape: f32[1,128], index: 8, kind: input, shape index: {}]
  %s9 = inlined_call_operand.vmem [shape: f32[56,128], index: 9, kind: output, shape index: {}]
  %s10 = sld [smem:[#allocation0]]
  $region46: #{actor_forward.1} parent=0
    _
  %s12 = ssub.s32 1, %s10
  %s13 = scalar_select 0, %s12, %s10
  // Predicated region
  $region2: #{actor_forward.1} parent=0 // pred_check
    _
  $region3: #{actor_forward.1} parent=0 // pred_check_branch
    %15 = sbr.rel (0) target = $region5
  $region4: #{actor_forward.1} parent=0 // pred_region
    _
  $region5: #{actor_forward.1} parent=0 // pred_fallthru
    _
  // Predicated region
  $region6: #{actor_forward.1} parent=0 // pred_check
    _
  $region7: #{actor_forward.1} parent=0 // pred_check_branch
    %17 = sbr.rel (0) target = $region9
  $region8: #{actor_forward.1} parent=0 // pred_region
    _
  $region9: #{actor_forward.1} parent=0 // pred_fallthru
    _
  // Predicated region
  $region10: #{actor_forward.1} parent=0 // pred_check
    _
  $region11: #{actor_forward.1} parent=0 // pred_check_branch
    %19 = sbr.rel (0) target = $region13
  $region12: #{actor_forward.1} parent=0 // pred_region
    _
  $region13: #{actor_forward.1} parent=0 // pred_fallthru
    _
  // Predicated region
  $region14: #{actor_forward.1} parent=0 // pred_check
    _
  $region15: #{actor_forward.1} parent=0 // pred_check_branch
    %21 = sbr.rel (0) target = $region17
  $region16: #{actor_forward.1} parent=0 // pred_region
    _
  $region17: #{actor_forward.1} parent=0 // pred_fallthru
    _
  // Predicated region
  $region18: #{actor_forward.1} parent=0 // pred_check
    _
  $region19: #{actor_forward.1} parent=0 // pred_check_branch
    %23 = sbr.rel (0) target = $region21
  $region20: #{actor_forward.1} parent=0 // pred_region
    _
  $region21: #{actor_forward.1} parent=0 // pred_fallthru
    _
  // Predicated region
  $region22: #{actor_forward.1} parent=0 // pred_check
    _
  $region23: #{actor_forward.1} parent=0 // pred_check_branch
    %25 = sbr.rel (0) target = $region25
  $region24: #{actor_forward.1} parent=0 // pred_region
    _
  $region25: #{actor_forward.1} parent=0 // pred_fallthru
    _
  // Predicated region
  $region26: #{actor_forward.1} parent=0 // pred_check
    _
  $region27: #{actor_forward.1} parent=0 // pred_check_branch
    %27 = sbr.rel (0) target = $region29
  $region28: #{actor_forward.1} parent=0 // pred_region
    _
  $region29: #{actor_forward.1} parent=0 // pred_fallthru
    _
  // Predicated region
  $region30: #{actor_forward.1} parent=0 // pred_check
    _
  $region31: #{actor_forward.1} parent=0 // pred_check_branch
    %29 = sbr.rel (0) target = $region33
  $region32: #{actor_forward.1} parent=0 // pred_region
    _
  $region33: #{actor_forward.1} parent=0 // pred_fallthru
    _
  // Predicated region
  $region34: #{actor_forward.1} parent=0 // pred_check
    _
  $region35: #{actor_forward.1} parent=0 // pred_check_branch
    %31 = sbr.rel (0) target = $region37
  $region36: #{actor_forward.1} parent=0 // pred_region
    _
  $region37: #{actor_forward.1} parent=0 // pred_fallthru
    _
  %v32 = vld [vmem:[%s0] sm:$0xff]
  %v33 = vld [vmem:[%s0 + $0x8] sm:$0xff]
  %v34 = vld [vmem:[%s0 + $0x10] sm:$0xff]
  %v35 = vld [vmem:[%s0 + $0x18] sm:$0xff]
  %v36 = vld [vmem:[%s0 + $0x20] sm:$0xff]
  %v37 = vld [vmem:[%s0 + $0x28] sm:$0xff]
  %v38 = vld [vmem:[%s0 + $0x30] sm:$0xff]
  %v39 = vld [vmem:[%s1] sm:$0xff]
  %v40 = vld [vmem:[%s1 + $0x8] sm:$0xff]
  %v41 = vld [vmem:[%s2] sm:$0x1]
  %v43 = vlaneseq
  %v44 = vshrl.u32 %v43, 7
  %v45 = vsub.s32 0, %v44
  %v46 = vrot.slane %v41, %v45
  %vm48 = vcmask 130048
  %v50 = vsel %vm48, %v32, 0
  %v53 = vsel %vm48, %v33, 0
  %v56 = vsel %vm48, %v34, 0
  %v59 = vsel %vm48, %v35, 0
  %v62 = vsel %vm48, %v36, 0
  %v65 = vsel %vm48, %v37, 0
  %v68 = vsel %vm48, %v38, 0
  %70 = vmatprep.subr.mxu0 0.0
  %71 = vmatpush1.msra.mxu0 0.0
  %72 = vmatprep.subr.mxu0 0.0
  %73 = vmatpush1.msra.mxu0 0.0
  %74 = vmatprep.subr.mxu0 0.0
  %75 = vmatpush1.msra.mxu0 0.0
  %76 = vmatprep.subr.mxu0 0.0
  %77 = vmatpush1.msra.mxu0 0.0
  %78 = vmatprep.subr.mxu0 0.0
  %79 = vmatpush1.msra.mxu0 0.0
  %80 = vmatprep.subr.mxu0 0.0
  %81 = vmatpush1.msra.mxu0 0.0
  %82 = vmatprep.subr.mxu0 0.0
  %83 = vmatpush1.msra.mxu0 0.0
  %84 = vmatprep.subr.mxu0 0.0
  %85 = vmatpush1.msra.mxu0 0.0
  %86 = vmatprep.subr.mxu0 0.0
  %87 = vmatpush1.msra.mxu0 0.0
  %88 = vmatprep.subr.mxu0 0.0
  %89 = vmatpush1.msra.mxu0 0.0
  %90 = vmatprep.subr.mxu0 0.0
  %91 = vmatpush1.msra.mxu0 0.0
  %92 = vmatprep.subr.mxu0 0.0
  %93 = vmatpush1.msra.mxu0 0.0
  %94 = vmatprep.subr.mxu0 0.0
  %95 = vmatpush1.msra.mxu0 0.0
  %96 = vmatprep.subr.mxu0 0.0
  %97 = vmatpush1.msra.mxu0 0.0
  %98 = vmatprep.subr.mxu0 0.0
  %99 = vmatpush1.msra.mxu0 %v40
  %100 = vmatprep.subr.mxu0 0.0
  %101 = vmatpush1.msra.mxu0 %v39
  %102 = vmatprep.subr.mxu0 0.0
  %103 = vmatpush2.msra.mxu0 0.0
  %104 = vmatprep.subr.mxu0 0.0
  %105 = vmatpush2.msra.mxu0 0.0
  %106 = vmatprep.subr.mxu0 0.0
  %107 = vmatpush2.msra.mxu0 0.0
  %108 = vmatprep.subr.mxu0 0.0
  %109 = vmatpush2.msra.mxu0 0.0
  %110 = vmatprep.subr.mxu0 0.0
  %111 = vmatpush2.msra.mxu0 0.0
  %112 = vmatprep.subr.mxu0 0.0
  %113 = vmatpush2.msra.mxu0 0.0
  %114 = vmatprep.subr.mxu0 0.0
  %115 = vmatpush2.msra.mxu0 0.0
  %116 = vmatprep.subr.mxu0 0.0
  %117 = vmatpush2.msra.mxu0 0.0
  %118 = vmatprep.subr.mxu0 0.0
  %119 = vmatpush2.msra.mxu0 0.0
  %120 = vmatprep.subr.mxu0 0.0
  %121 = vmatpush2.msra.mxu0 0.0
  %122 = vmatprep.subr.mxu0 0.0
  %123 = vmatpush2.msra.mxu0 0.0
  %124 = vmatprep.subr.mxu0 0.0
  %125 = vmatpush2.msra.mxu0 0.0
  %126 = vmatprep.subr.mxu0 0.0
  %127 = vmatpush2.msra.mxu0 0.0
  %128 = vmatprep.subr.mxu0 0.0
  %129 = vmatpush2.msra.mxu0 0.0
  %130 = vmatprep.subr.mxu0 0.0
  %131 = vmatpush2.msra.mxu0 0.0
  %132 = vmatprep.subr.mxu0 0.0
  %133 = vmatpush2.msra.mxu0 0.0
  %134 = vmatprep.mubr.f32.mxu0 0.0
  %135 = vmatmul.mubr.f32.gmra.mxu0 %v50
  %v136 = vpop.f32.mrf.mxu0
  %v137 = vadd.f32 %v46, %v136
  %v138 = vpop.f32.mrf.mxu0
  %139 = vmatprep.mubr.f32.mxu0 0.0
  %140 = vmatmul.mubr.f32.gmra.mxu0 %v53
  %v141 = vpop.f32.mrf.mxu0
  %v142 = vadd.f32 %v46, %v141
  %v143 = vpop.f32.mrf.mxu0
  %144 = vmatprep.mubr.f32.mxu0 0.0
  %145 = vmatmul.mubr.f32.gmra.mxu0 %v56
  %v146 = vpop.f32.mrf.mxu0
  %v147 = vadd.f32 %v46, %v146
  %v148 = vpop.f32.mrf.mxu0
  %149 = vmatprep.mubr.f32.mxu0 0.0
  %150 = vmatmul.mubr.f32.gmra.mxu0 %v59
  %v151 = vpop.f32.mrf.mxu0
  %v152 = vadd.f32 %v46, %v151
  %v153 = vpop.f32.mrf.mxu0
  %154 = vmatprep.mubr.f32.mxu0 0.0
  %155 = vmatmul.mubr.f32.gmra.mxu0 %v62
  %v156 = vpop.f32.mrf.mxu0
  %v157 = vadd.f32 %v46, %v156
  %v158 = vpop.f32.mrf.mxu0
  %159 = vmatprep.mubr.f32.mxu0 0.0
  %160 = vmatmul.mubr.f32.gmra.mxu0 %v65
  %v161 = vpop.f32.mrf.mxu0
  %v162 = vadd.f32 %v46, %v161
  %v163 = vpop.f32.mrf.mxu0
  %164 = vmatprep.mubr.f32.mxu0 0.0
  %165 = vmatmul.mubr.f32.gmra.mxu0 %v68
  %v166 = vpop.f32.mrf.mxu0
  %v167 = vadd.f32 %v46, %v166
  %v168 = vpop.f32.mrf.mxu0
  %169 = vdwg.mxu0
  %v170 = vmax.f32 %v137, 0.0
  %v171 = vmax.f32 %v142, 0.0
  %v172 = vmax.f32 %v147, 0.0
  %v173 = vmax.f32 %v152, 0.0
  %v174 = vmax.f32 %v157, 0.0
  %v175 = vmax.f32 %v162, 0.0
  %v176 = vmax.f32 %v167, 0.0
  %v177 = vld [vmem:[%s3] sm:$0xff]
  %v178 = vld [vmem:[%s3 + $0x8] sm:$0xff]
  %v179 = vld [vmem:[%s3 + $0x10] sm:$0xff]
  %v180 = vld [vmem:[%s3 + $0x18] sm:$0xff]
  %v181 = vld [vmem:[%s4] sm:$0x1]
  %v183 = vlaneseq
  %v184 = vshrl.u32 %v183, 7
  %v185 = vsub.s32 0, %v184
  %v186 = vrot.slane %v181, %v185
  %vm188 = vcmask 261120
  %v190 = vsel %vm188, %v170, 0
  %v193 = vsel %vm188, %v171, 0
  %v196 = vsel %vm188, %v172, 0
  %v199 = vsel %vm188, %v173, 0
  %v202 = vsel %vm188, %v174, 0
  %v205 = vsel %vm188, %v175, 0
  %v208 = vsel %vm188, %v176, 0
  %210 = vmatprep.subr.mxu0 0.0
  %211 = vmatpush1.msra.mxu0 0.0
  %212 = vmatprep.subr.mxu0 0.0
  %213 = vmatpush1.msra.mxu0 0.0
  %214 = vmatprep.subr.mxu0 0.0
  %215 = vmatpush1.msra.mxu0 0.0
  %216 = vmatprep.subr.mxu0 0.0
  %217 = vmatpush1.msra.mxu0 0.0
  %218 = vmatprep.subr.mxu0 0.0
  %219 = vmatpush1.msra.mxu0 0.0
  %220 = vmatprep.subr.mxu0 0.0
  %221 = vmatpush1.msra.mxu0 0.0
  %222 = vmatprep.subr.mxu0 0.0
  %223 = vmatpush1.msra.mxu0 0.0
  %224 = vmatprep.subr.mxu0 0.0
  %225 = vmatpush1.msra.mxu0 0.0
  %226 = vmatprep.subr.mxu0 0.0
  %227 = vmatpush1.msra.mxu0 0.0
  %228 = vmatprep.subr.mxu0 0.0
  %229 = vmatpush1.msra.mxu0 0.0
  %230 = vmatprep.subr.mxu0 0.0
  %231 = vmatpush1.msra.mxu0 0.0
  %232 = vmatprep.subr.mxu0 0.0
  %233 = vmatpush1.msra.mxu0 0.0
  %234 = vmatprep.subr.mxu0 0.0
  %235 = vmatpush1.msra.mxu0 %v180
  %236 = vmatprep.subr.mxu0 0.0
  %237 = vmatpush1.msra.mxu0 %v179
  %238 = vmatprep.subr.mxu0 0.0
  %239 = vmatpush1.msra.mxu0 %v178
  %240 = vmatprep.subr.mxu0 0.0
  %241 = vmatpush1.msra.mxu0 %v177
  %242 = vmatprep.subr.mxu0 0.0
  %243 = vmatpush2.msra.mxu0 0.0
  %244 = vmatprep.subr.mxu0 0.0
  %245 = vmatpush2.msra.mxu0 0.0
  %246 = vmatprep.subr.mxu0 0.0
  %247 = vmatpush2.msra.mxu0 0.0
  %248 = vmatprep.subr.mxu0 0.0
  %249 = vmatpush2.msra.mxu0 0.0
  %250 = vmatprep.subr.mxu0 0.0
  %251 = vmatpush2.msra.mxu0 0.0
  %252 = vmatprep.subr.mxu0 0.0
  %253 = vmatpush2.msra.mxu0 0.0
  %254 = vmatprep.subr.mxu0 0.0
  %255 = vmatpush2.msra.mxu0 0.0
  %256 = vmatprep.subr.mxu0 0.0
  %257 = vmatpush2.msra.mxu0 0.0
  %258 = vmatprep.subr.mxu0 0.0
  %259 = vmatpush2.msra.mxu0 0.0
  %260 = vmatprep.subr.mxu0 0.0
  %261 = vmatpush2.msra.mxu0 0.0
  %262 = vmatprep.subr.mxu0 0.0
  %263 = vmatpush2.msra.mxu0 0.0
  %264 = vmatprep.subr.mxu0 0.0
  %265 = vmatpush2.msra.mxu0 0.0
  %266 = vmatprep.subr.mxu0 0.0
  %267 = vmatpush2.msra.mxu0 0.0
  %268 = vmatprep.subr.mxu0 0.0
  %269 = vmatpush2.msra.mxu0 0.0
  %270 = vmatprep.subr.mxu0 0.0
  %271 = vmatpush2.msra.mxu0 0.0
  %272 = vmatprep.subr.mxu0 0.0
  %273 = vmatpush2.msra.mxu0 0.0
  %274 = vmatprep.mubr.f32.mxu0 0.0
  %275 = vmatmul.mubr.f32.gmra.mxu0 %v190
  %v276 = vpop.f32.mrf.mxu0
  %v277 = vadd.f32 %v186, %v276
  %v278 = vpop.f32.mrf.mxu0
  %279 = vmatprep.mubr.f32.mxu0 0.0
  %280 = vmatmul.mubr.f32.gmra.mxu0 %v193
  %v281 = vpop.f32.mrf.mxu0
  %v282 = vadd.f32 %v186, %v281
  %v283 = vpop.f32.mrf.mxu0
  %284 = vmatprep.mubr.f32.mxu0 0.0
  %285 = vmatmul.mubr.f32.gmra.mxu0 %v196
  %v286 = vpop.f32.mrf.mxu0
  %v287 = vadd.f32 %v186, %v286
  %v288 = vpop.f32.mrf.mxu0
  %289 = vmatprep.mubr.f32.mxu0 0.0
  %290 = vmatmul.mubr.f32.gmra.mxu0 %v199
  %v291 = vpop.f32.mrf.mxu0
  %v292 = vadd.f32 %v186, %v291
  %v293 = vpop.f32.mrf.mxu0
  %294 = vmatprep.mubr.f32.mxu0 0.0
  %295 = vmatmul.mubr.f32.gmra.mxu0 %v202
  %v296 = vpop.f32.mrf.mxu0
  %v297 = vadd.f32 %v186, %v296
  %v298 = vpop.f32.mrf.mxu0
  %299 = vmatprep.mubr.f32.mxu0 0.0
  %300 = vmatmul.mubr.f32.gmra.mxu0 %v205
  %v301 = vpop.f32.mrf.mxu0
  %v302 = vadd.f32 %v186, %v301
  %v303 = vpop.f32.mrf.mxu0
  %304 = vmatprep.mubr.f32.mxu0 0.0
  %305 = vmatmul.mubr.f32.gmra.mxu0 %v208
  %v306 = vpop.f32.mrf.mxu0
  %v307 = vadd.f32 %v186, %v306
  %v308 = vpop.f32.mrf.mxu0
  %309 = vdwg.mxu0
  %v310 = vmax.f32 %v277, 0.0
  %v311 = vmax.f32 %v282, 0.0
  %v312 = vmax.f32 %v287, 0.0
  %v313 = vmax.f32 %v292, 0.0
  %v314 = vmax.f32 %v297, 0.0
  %v315 = vmax.f32 %v302, 0.0
  %v316 = vmax.f32 %v307, 0.0
  %v317 = vld [vmem:[%s5] sm:$0xff]
  %v318 = vld [vmem:[%s5 + $0x8] sm:$0xff]
  %v319 = vld [vmem:[%s5 + $0x10] sm:$0xff]
  %v320 = vld [vmem:[%s5 + $0x18] sm:$0xff]
  %v321 = vld [vmem:[%s6] sm:$0x1]
  %v323 = vlaneseq
  %v324 = vshrl.u32 %v323, 7
  %v325 = vsub.s32 0, %v324
  %v326 = vrot.slane %v321, %v325
  %v329 = vsel %vm188, %v310, 0
  %v332 = vsel %vm188, %v311, 0
  %v335 = vsel %vm188, %v312, 0
  %v338 = vsel %vm188, %v313, 0
  %v341 = vsel %vm188, %v314, 0
  %v344 = vsel %vm188, %v315, 0
  %v347 = vsel %vm188, %v316, 0
  %349 = vmatprep.subr.mxu0 0.0
  %350 = vmatpush1.msra.mxu0 0.0
  %351 = vmatprep.subr.mxu0 0.0
  %352 = vmatpush1.msra.mxu0 0.0
  %353 = vmatprep.subr.mxu0 0.0
  %354 = vmatpush1.msra.mxu0 0.0
  %355 = vmatprep.subr.mxu0 0.0
  %356 = vmatpush1.msra.mxu0 0.0
  %357 = vmatprep.subr.mxu0 0.0
  %358 = vmatpush1.msra.mxu0 0.0
  %359 = vmatprep.subr.mxu0 0.0
  %360 = vmatpush1.msra.mxu0 0.0
  %361 = vmatprep.subr.mxu0 0.0
  %362 = vmatpush1.msra.mxu0 0.0
  %363 = vmatprep.subr.mxu0 0.0
  %364 = vmatpush1.msra.mxu0 0.0
  %365 = vmatprep.subr.mxu0 0.0
  %366 = vmatpush1.msra.mxu0 0.0
  %367 = vmatprep.subr.mxu0 0.0
  %368 = vmatpush1.msra.mxu0 0.0
  %369 = vmatprep.subr.mxu0 0.0
  %370 = vmatpush1.msra.mxu0 0.0
  %371 = vmatprep.subr.mxu0 0.0
  %372 = vmatpush1.msra.mxu0 0.0
  %373 = vmatprep.subr.mxu0 0.0
  %374 = vmatpush1.msra.mxu0 %v320
  %375 = vmatprep.subr.mxu0 0.0
  %376 = vmatpush1.msra.mxu0 %v319
  %377 = vmatprep.subr.mxu0 0.0
  %378 = vmatpush1.msra.mxu0 %v318
  %379 = vmatprep.subr.mxu0 0.0
  %380 = vmatpush1.msra.mxu0 %v317
  %381 = vmatprep.subr.mxu0 0.0
  %382 = vmatpush2.msra.mxu0 0.0
  %383 = vmatprep.subr.mxu0 0.0
  %384 = vmatpush2.msra.mxu0 0.0
  %385 = vmatprep.subr.mxu0 0.0
  %386 = vmatpush2.msra.mxu0 0.0
  %387 = vmatprep.subr.mxu0 0.0
  %388 = vmatpush2.msra.mxu0 0.0
  %389 = vmatprep.subr.mxu0 0.0
  %390 = vmatpush2.msra.mxu0 0.0
  %391 = vmatprep.subr.mxu0 0.0
  %392 = vmatpush2.msra.mxu0 0.0
  %393 = vmatprep.subr.mxu0 0.0
  %394 = vmatpush2.msra.mxu0 0.0
  %395 = vmatprep.subr.mxu0 0.0
  %396 = vmatpush2.msra.mxu0 0.0
  %397 = vmatprep.subr.mxu0 0.0
  %398 = vmatpush2.msra.mxu0 0.0
  %399 = vmatprep.subr.mxu0 0.0
  %400 = vmatpush2.msra.mxu0 0.0
  %401 = vmatprep.subr.mxu0 0.0
  %402 = vmatpush2.msra.mxu0 0.0
  %403 = vmatprep.subr.mxu0 0.0
  %404 = vmatpush2.msra.mxu0 0.0
  %405 = vmatprep.subr.mxu0 0.0
  %406 = vmatpush2.msra.mxu0 0.0
  %407 = vmatprep.subr.mxu0 0.0
  %408 = vmatpush2.msra.mxu0 0.0
  %409 = vmatprep.subr.mxu0 0.0
  %410 = vmatpush2.msra.mxu0 0.0
  %411 = vmatprep.subr.mxu0 0.0
  %412 = vmatpush2.msra.mxu0 0.0
  %413 = vmatprep.mubr.f32.mxu0 0.0
  %414 = vmatmul.mubr.f32.gmra.mxu0 %v329
  %v415 = vpop.f32.mrf.mxu0
  %v416 = vadd.f32 %v326, %v415
  %v417 = vpop.f32.mrf.mxu0
  %418 = vmatprep.mubr.f32.mxu0 0.0
  %419 = vmatmul.mubr.f32.gmra.mxu0 %v332
  %v420 = vpop.f32.mrf.mxu0
  %v421 = vadd.f32 %v326, %v420
  %v422 = vpop.f32.mrf.mxu0
  %423 = vmatprep.mubr.f32.mxu0 0.0
  %424 = vmatmul.mubr.f32.gmra.mxu0 %v335
  %v425 = vpop.f32.mrf.mxu0
  %v426 = vadd.f32 %v326, %v425
  %v427 = vpop.f32.mrf.mxu0
  %428 = vmatprep.mubr.f32.mxu0 0.0
  %429 = vmatmul.mubr.f32.gmra.mxu0 %v338
  %v430 = vpop.f32.mrf.mxu0
  %v431 = vadd.f32 %v326, %v430
  %v432 = vpop.f32.mrf.mxu0
  %433 = vmatprep.mubr.f32.mxu0 0.0
  %434 = vmatmul.mubr.f32.gmra.mxu0 %v341
  %v435 = vpop.f32.mrf.mxu0
  %v436 = vadd.f32 %v326, %v435
  %v437 = vpop.f32.mrf.mxu0
  %438 = vmatprep.mubr.f32.mxu0 0.0
  %439 = vmatmul.mubr.f32.gmra.mxu0 %v344
  %v440 = vpop.f32.mrf.mxu0
  %v441 = vadd.f32 %v326, %v440
  %v442 = vpop.f32.mrf.mxu0
  %443 = vmatprep.mubr.f32.mxu0 0.0
  %444 = vmatmul.mubr.f32.gmra.mxu0 %v347
  %v445 = vpop.f32.mrf.mxu0
  %v446 = vadd.f32 %v326, %v445
  %v447 = vpop.f32.mrf.mxu0
  %448 = vdwg.mxu0
  %v449 = vmax.f32 %v416, 0.0
  %v450 = vmax.f32 %v421, 0.0
  %v451 = vmax.f32 %v426, 0.0
  %v452 = vmax.f32 %v431, 0.0
  %v453 = vmax.f32 %v436, 0.0
  %v454 = vmax.f32 %v441, 0.0
  %v455 = vmax.f32 %v446, 0.0
  %v456 = vld [vmem:[%s7] sm:$0xff]
  %v457 = vld [vmem:[%s7 + $0x8] sm:$0xff]
  %v458 = vld [vmem:[%s7 + $0x10] sm:$0xff]
  %v459 = vld [vmem:[%s7 + $0x18] sm:$0xff]
  %v460 = vld [vmem:[%s8] sm:$0x1]
  %v462 = vlaneseq
  %v463 = vshrl.u32 %v462, 7
  %v464 = vsub.s32 0, %v463
  %v465 = vrot.slane %v460, %v464
  %v468 = vsel %vm188, %v449, 0
  %v471 = vsel %vm188, %v450, 0
  %v474 = vsel %vm188, %v451, 0
  %v477 = vsel %vm188, %v452, 0
  %v480 = vsel %vm188, %v453, 0
  %v483 = vsel %vm188, %v454, 0
  %v486 = vsel %vm188, %v455, 0
  %488 = vmatprep.subr.mxu0 0.0
  %489 = vmatpush1.msra.mxu0 0.0
  %490 = vmatprep.subr.mxu0 0.0
  %491 = vmatpush1.msra.mxu0 0.0
  %492 = vmatprep.subr.mxu0 0.0
  %493 = vmatpush1.msra.mxu0 0.0
  %494 = vmatprep.subr.mxu0 0.0
  %495 = vmatpush1.msra.mxu0 0.0
  %496 = vmatprep.subr.mxu0 0.0
  %497 = vmatpush1.msra.mxu0 0.0
  %498 = vmatprep.subr.mxu0 0.0
  %499 = vmatpush1.msra.mxu0 0.0
  %500 = vmatprep.subr.mxu0 0.0
  %501 = vmatpush1.msra.mxu0 0.0
  %502 = vmatprep.subr.mxu0 0.0
  %503 = vmatpush1.msra.mxu0 0.0
  %504 = vmatprep.subr.mxu0 0.0
  %505 = vmatpush1.msra.mxu0 0.0
  %506 = vmatprep.subr.mxu0 0.0
  %507 = vmatpush1.msra.mxu0 0.0
  %508 = vmatprep.subr.mxu0 0.0
  %509 = vmatpush1.msra.mxu0 0.0
  %510 = vmatprep.subr.mxu0 0.0
  %511 = vmatpush1.msra.mxu0 0.0
  %512 = vmatprep.subr.mxu0 0.0
  %513 = vmatpush1.msra.mxu0 %v459
  %514 = vmatprep.subr.mxu0 0.0
  %515 = vmatpush1.msra.mxu0 %v458
  %516 = vmatprep.subr.mxu0 0.0
  %517 = vmatpush1.msra.mxu0 %v457
  %518 = vmatprep.subr.mxu0 0.0
  %519 = vmatpush1.msra.mxu0 %v456
  %520 = vmatprep.subr.mxu0 0.0
  %521 = vmatpush2.msra.mxu0 0.0
  %522 = vmatprep.subr.mxu0 0.0
  %523 = vmatpush2.msra.mxu0 0.0
  %524 = vmatprep.subr.mxu0 0.0
  %525 = vmatpush2.msra.mxu0 0.0
  %526 = vmatprep.subr.mxu0 0.0
  %527 = vmatpush2.msra.mxu0 0.0
  %528 = vmatprep.subr.mxu0 0.0
  %529 = vmatpush2.msra.mxu0 0.0
  %530 = vmatprep.subr.mxu0 0.0
  %531 = vmatpush2.msra.mxu0 0.0
  %532 = vmatprep.subr.mxu0 0.0
  %533 = vmatpush2.msra.mxu0 0.0
  %534 = vmatprep.subr.mxu0 0.0
  %535 = vmatpush2.msra.mxu0 0.0
  %536 = vmatprep.subr.mxu0 0.0
  %537 = vmatpush2.msra.mxu0 0.0
  %538 = vmatprep.subr.mxu0 0.0
  %539 = vmatpush2.msra.mxu0 0.0
  %540 = vmatprep.subr.mxu0 0.0
  %541 = vmatpush2.msra.mxu0 0.0
  %542 = vmatprep.subr.mxu0 0.0
  %543 = vmatpush2.msra.mxu0 0.0
  %544 = vmatprep.subr.mxu0 0.0
  %545 = vmatpush2.msra.mxu0 0.0
  %546 = vmatprep.subr.mxu0 0.0
  %547 = vmatpush2.msra.mxu0 0.0
  %548 = vmatprep.subr.mxu0 0.0
  %549 = vmatpush2.msra.mxu0 0.0
  %550 = vmatprep.subr.mxu0 0.0
  %551 = vmatpush2.msra.mxu0 0.0
  %552 = vmatprep.mubr.f32.mxu0 0.0
  %553 = vmatmul.mubr.f32.gmra.mxu0 %v468
  %v554 = vpop.f32.mrf.mxu0
  %v555 = vadd.f32 %v465, %v554
  %v556 = vpop.f32.mrf.mxu0
  %557 = vmatprep.mubr.f32.mxu0 0.0
  %558 = vmatmul.mubr.f32.gmra.mxu0 %v471
  %v559 = vpop.f32.mrf.mxu0
  %v560 = vadd.f32 %v465, %v559
  %v561 = vpop.f32.mrf.mxu0
  %562 = vmatprep.mubr.f32.mxu0 0.0
  %563 = vmatmul.mubr.f32.gmra.mxu0 %v474
  %v564 = vpop.f32.mrf.mxu0
  %v565 = vadd.f32 %v465, %v564
  %v566 = vpop.f32.mrf.mxu0
  %567 = vmatprep.mubr.f32.mxu0 0.0
  %568 = vmatmul.mubr.f32.gmra.mxu0 %v477
  %v569 = vpop.f32.mrf.mxu0
  %v570 = vadd.f32 %v465, %v569
  %v571 = vpop.f32.mrf.mxu0
  %572 = vmatprep.mubr.f32.mxu0 0.0
  %573 = vmatmul.mubr.f32.gmra.mxu0 %v480
  %v574 = vpop.f32.mrf.mxu0
  %v575 = vadd.f32 %v465, %v574
  %v576 = vpop.f32.mrf.mxu0
  %577 = vmatprep.mubr.f32.mxu0 0.0
  %578 = vmatmul.mubr.f32.gmra.mxu0 %v483
  %v579 = vpop.f32.mrf.mxu0
  %v580 = vadd.f32 %v465, %v579
  %v581 = vpop.f32.mrf.mxu0
  %582 = vmatprep.mubr.f32.mxu0 0.0
  %583 = vmatmul.mubr.f32.gmra.mxu0 %v486
  %v584 = vpop.f32.mrf.mxu0
  %v585 = vadd.f32 %v465, %v584
  %v586 = vpop.f32.mrf.mxu0
  %587 = vdwg.mxu0
  %v588 = vlaneseq
  %v589 = vshrl.u32 %v588, 7
  %v590 = vadd.s32 %v589, 8
  %v591 = vadd.s32 %v589, 16
  %v592 = vadd.s32 %v589, 24
  %v593 = vadd.s32 %v589, 32
  %v594 = vadd.s32 %v589, 40
  %v595 = vadd.s32 %v589, 48
  %vm596 = vcmp.lt.s32.totalorder %v589, 50
  %vm597 = vcmp.lt.s32.totalorder %v590, 50
  %vm598 = vcmp.lt.s32.totalorder %v591, 50
  %vm599 = vcmp.lt.s32.totalorder %v592, 50
  %vm600 = vcmp.lt.s32.totalorder %v593, 50
  %vm601 = vcmp.lt.s32.totalorder %v594, 50
  %vm602 = vcmp.lt.s32.totalorder %v595, 50
  %v603 = vsel %vm596, %v555, -inf
  %v604 = vsel %vm597, %v560, -inf
  %v605 = vsel %vm598, %v565, -inf
  %v606 = vsel %vm599, %v570, -inf
  %v607 = vsel %vm600, %v575, -inf
  %v608 = vsel %vm601, %v580, -inf
  %v609 = vsel %vm602, %v585, -inf
  %v610 = vmax.f32 %v603, %v607
  %v611 = vmax.f32 %v604, %v608
  %v612 = vmax.f32 %v605, %v609
  %v613 = vmax.f32 %v610, %v611
  %v614 = vmax.f32 %v612, %v606
  %v615 = vmax.f32 %v613, %v614
  %v616 = vrot.slane %v615, 4
  %v617 = vmax.f32 %v615, %v616
  %v618 = vrot.slane %v617, 2
  %v619 = vmax.f32 %v617, %v618
  %v620 = vrot.slane %v619, 1
  %v621 = vmax.f32 %v619, %v620
  %v622 = vsub.f32 %v603, %v621
  %v623 = vsub.f32 %v604, %v621
  %v624 = vsub.f32 %v605, %v621
  %v625 = vsub.f32 %v606, %v621
  %v626 = vsub.f32 %v607, %v621
  %v627 = vsub.f32 %v608, %v621
  %v628 = vsub.f32 %v609, %v621
  %v629 = vmul.f32 %v622, 1.442695
  %v630 = vpow.pop %v629
  %v631 = vmul.f32 %v623, 1.442695
  %v632 = vpow.pop %v631
  %v633 = vmul.f32 %v624, 1.442695
  %v634 = vpow.pop %v633
  %v635 = vmul.f32 %v625, 1.442695
  %v636 = vpow.pop %v635
  %v637 = vmul.f32 %v626, 1.442695
  %v638 = vpow.pop %v637
  %v639 = vmul.f32 %v627, 1.442695
  %v640 = vpow.pop %v639
  %v641 = vmul.f32 %v628, 1.442695
  %v642 = vpow.pop %v641
  %v643 = vadd.f32 %v630, %v632
  %v644 = vadd.f32 %v643, %v634
  %v645 = vadd.f32 %v644, %v636
  %v646 = vadd.f32 %v645, %v638
  %v647 = vadd.f32 %v646, %v640
  %v648 = vadd.f32 %v647, %v642
  %v649 = vrot.slane %v648, 4
  %v650 = vadd.f32 %v648, %v649
  %v651 = vrot.slane %v650, 2
  %v652 = vadd.f32 %v650, %v651
  %v653 = vrot.slane %v652, 1
  %v654 = vadd.f32 %v652, %v653
  %v655 = vrcp.pop %v654
  %v656 = vmul.f32 %v654, %v655
  %v657 = vsub.f32 2.0, %v656
  %v658 = vmul.f32 %v655, %v657
  %v659 = vmul.f32 %v630, %v658
  %v660 = vmul.f32 %v632, %v658
  %v661 = vmul.f32 %v634, %v658
  %v662 = vmul.f32 %v636, %v658
  %v663 = vmul.f32 %v638, %v658
  %v664 = vmul.f32 %v640, %v658
  %v665 = vmul.f32 %v642, %v658
  %666 = vst [vmem:[%s9] sm:$0xff] %v659
  %667 = vst [vmem:[%s9 + $0x8] sm:$0xff] %v660
  %668 = vst [vmem:[%s9 + $0x10] sm:$0xff] %v661
  %669 = vst [vmem:[%s9 + $0x18] sm:$0xff] %v662
  %670 = vst [vmem:[%s9 + $0x20] sm:$0xff] %v663
  %671 = vst [vmem:[%s9 + $0x28] sm:$0xff] %v664
  %672 = vst [vmem:[%s9 + $0x30] sm:$0xff] %v665
  // Predicated region
  $region38: #{actor_forward.1} parent=0 // pred_check
    _
  $region39: #{actor_forward.1} parent=0 // pred_check_branch
    %674 = sbr.rel (0) target = $region41
  $region40: #{actor_forward.1} parent=0 // pred_region
    _
  $region41: #{actor_forward.1} parent=0 // pred_fallthru
    _
  // Predicated region
  $region42: #{actor_forward.1} parent=0 // pred_check
    _
  $region43: #{actor_forward.1} parent=0 // pred_check_branch
    %676 = sbr.rel (0) target = $region45
  $region44: #{actor_forward.1} parent=0 // pred_region
    _
  $region45: #{actor_forward.1} parent=0 // pred_fallthru
    _

</llo_original>
